<compile_context>
chip_gen: v5e
topology: v5e:2x2
jax: 0.10.0
libtpu: 0.0.40
codegen_flags: <defaults>
</compile_context>

<pallas_src>
import functools
import math

import jax
import jax.numpy as jnp
from jax.experimental import pallas as pl
from jax.experimental.pallas import tpu as pltpu


_TRANSCENDENTAL_ACTS = {"Tanh", "GELU", "ELU", "SiLU", "Softplus", "Mish"}


def _round_up(n, m):
    return ((n + m - 1) // m) * m


def _maybe_cast(arr, dt):
    """Cast only when needed (avoids a per-call HBM rewrite of the weights)."""
    return arr if arr.dtype == jnp.dtype(dt) else arr.astype(dt)


# ---------------------------------------------------------------------------
# Hardware queries (generation-aware VMEM budgets, TC count heuristic)
# ---------------------------------------------------------------------------
@functools.lru_cache(maxsize=None)
def _vmem_capacity_bytes():
    try:
        return int(pltpu.get_tpu_info().vmem_capacity_bytes)
    except Exception:
        pass
    try:
        kind = jax.devices()[0].device_kind.lower()
        if any(t in kind for t in ("v4", "v5", "v6", "trillium")):
            return 128 << 20
    except Exception:
        pass
    return 64 << 20  # conservative: v7x per-TensorCore VMEM


def _big_vmem():
    return _vmem_capacity_bytes() >= (128 << 20)


def _fused_budget_bytes():
    # ~96 MiB on 128 MiB chips (v5e/v6e), 40 MiB on v7x (64 MiB per TC).
    return (96 << 20) if _big_vmem() else (40 << 20)


def _vmem_limit_cap_bytes():
    return (100 << 20) if _big_vmem() else (48 << 20)


def _has_two_tensorcores():
    # Heuristic: only v7x (2 TCs/chip) has the halved 64 MiB per-TC VMEM.
    return not _big_vmem()


def _pick_tile(dim, candidates):
    for c in candidates:
        if dim % c == 0:
            return c
    return dim  # padded dims are multiples of 128, so we never get here


# ---------------------------------------------------------------------------
# Activations (f32, VPU/EUP)
# ---------------------------------------------------------------------------
def _apply_activation(y, act, gelu_approx=False):
    if act == "Identity":
        return y
    if act == "Tanh":
        return jnp.tanh(y)
    if act == "ReLU":
        return jnp.maximum(y, 0.0)
    if act == "GELU":
        # approximate=False (erf) matches torch.nn.GELU's default; the tanh
        # form runs on the EUP (free VLIW slot) when parity allows.
        return jax.nn.gelu(y, approximate=gelu_approx)
    if act == "ELU":
        return jnp.where(y > 0, y, jnp.expm1(y))
    if act == "SiLU":
        return y * jax.nn.sigmoid(y)
    if act == "Softplus":
        return jax.nn.softplus(y)
    if act == "Mish":
        return y * jnp.tanh(jax.nn.softplus(y))
    raise ValueError(f"unsupported activation {act}")


# ---------------------------------------------------------------------------
# Fused whole-MLP kernel (primary path)
# ---------------------------------------------------------------------------
def _fused_mlp_kernel(*refs, n_layers, acts, append_flags, has_append,
                      compute_dtype, gelu_approx):
    it = iter(refs)
    x_ref = next(it)
    a_ref = next(it) if has_append else None
    layer_refs = []
    for l in range(n_layers):
        w_ref = next(it)
        wa_ref = next(it) if append_flags[l] else None
        b_ref = next(it)
        layer_refs.append((w_ref, wa_ref, b_ref))
    o_ref = next(it)

    h = x_ref[...]                               # (tb, d_in_pad)
    a = a_ref[...] if has_append else None
    for (w_ref, wa_ref, b_ref), act in zip(layer_refs, acts):
        # MXU matmul with f32 accumulation; bias + activation in f32.
        y = jnp.dot(h.astype(compute_dtype), w_ref[...],
                    preferred_element_type=jnp.float32)
        if wa_ref is not None:
            # split matmul instead of concatenating (x, append)
            y = y + jnp.dot(a.astype(compute_dtype), wa_ref[...],
                            preferred_element_type=jnp.float32)
        y = y + b_ref[...]
        h = _apply_activation(y, act, gelu_approx)   # f32, stays in vregs/VMEM
    o_ref[...] = h.astype(o_ref.dtype)


def _fused_vmem_bytes(tb, params, cdt, d_app_pad=0):
    isz = jnp.dtype(cdt).itemsize
    total = 0
    max_w = params[0]["w_t"].shape[0]
    for p in params:
        # weights / biases are grid-invariant -> single-buffered (Buffered(1))
        total += p["w_t"].size * isz + p["b"].size * 4
        if p["w_a"] is not None:
            total += p["w_a"].size * isz
        max_w = max(max_w, p["w_t"].shape[1])
    d_in_pad = params[0]["w_t"].shape[0]
    d_out_pad = params[-1]["w_t"].shape[1]
    total += 2 * tb * d_in_pad * isz + 2 * tb * d_out_pad * 4  # x / out tiles
    if d_app_pad:
        total += 2 * tb * d_app_pad * isz
    total += 6 * tb * max_w * 4                                # f32 working set
    return total


def _mlp_fused(x_pad, a_pad, params, acts, cdt, tb, out_dtype, vmem_est,
               gelu_approx):
    B_pad, d_in_pad = x_pad.shape
    has_append = a_pad is not None
    n_layers = len(params)
    append_flags = tuple(p["w_a"] is not None for p in params)
    d_out_pad = params[-1]["w_t"].shape[1]
    invariant = lambda i: (0, 0)

    inputs = [x_pad]
    in_specs = [pl.BlockSpec((tb, d_in_pad), lambda i: (i, 0))]
    flops = 0
    trans = 0
    bytes_acc = x_pad.size * x_pad.dtype.itemsize
    if has_append:
        inputs.append(a_pad)
        in_specs.append(pl.BlockSpec((tb, a_pad.shape[1]), lambda i: (i, 0)))
        bytes_acc += a_pad.size * a_pad.dtype.itemsize

    for p, act in zip(params, acts):
        w = _maybe_cast(p["w_t"], cdt)
        inputs.append(w)
        in_specs.append(pl.BlockSpec(w.shape, invariant,
                                     pipeline_mode=pl.Buffered(1)))
        flops += 2 * B_pad * w.shape[0] * w.shape[1]
        bytes_acc += w.size * w.dtype.itemsize
        if p["w_a"] is not None:
            wa = _maybe_cast(p["w_a"], cdt)
            inputs.append(wa)
            in_specs.append(pl.BlockSpec(wa.shape, invariant,
                                         pipeline_mode=pl.Buffered(1)))
            flops += 2 * B_pad * wa.shape[0] * wa.shape[1]
            bytes_acc += wa.size * wa.dtype.itemsize
        b = p["b"]  # stored f32 (1, o_pad)
        inputs.append(b)
        in_specs.append(pl.BlockSpec(b.shape, invariant,
                                     pipeline_mode=pl.Buffered(1)))
        bytes_acc += b.size * 4
        if act in _TRANSCENDENTAL_ACTS:
            trans += B_pad * w.shape[1]
    bytes_acc += B_pad * d_out_pad * jnp.dtype(out_dtype).itemsize

    kernel = functools.partial(
        _fused_mlp_kernel, n_layers=n_layers, acts=tuple(acts),
        append_flags=append_flags, has_append=has_append,
        compute_dtype=cdt, gelu_approx=gelu_approx)

    vmem_limit = int(min(_vmem_limit_cap_bytes(),
                         max(32 << 20, int(vmem_est * 1.5))))
    return pl.pallas_call(
        kernel,
        out_shape=jax.ShapeDtypeStruct((B_pad, d_out_pad), out_dtype),
        grid_spec=pltpu.PrefetchScalarGridSpec(
            num_scalar_prefetch=0,
            grid=(B_pad // tb,),
            in_specs=in_specs,
            out_specs=pl.BlockSpec((tb, d_out_pad), lambda i: (i, 0)),
        ),
        compiler_params=pltpu.CompilerParams(
            dimension_semantics=("parallel",),
            vmem_limit_bytes=vmem_limit,
        ),
        cost_estimate=pl.CostEstimate(
            flops=int(flops), transcendentals=int(trans),
            bytes_accessed=int(bytes_acc)),
    )(*inputs)


# ---------------------------------------------------------------------------
# Per-layer K/N-tiled kernels (fallback for layers too large to fuse)
# ---------------------------------------------------------------------------
def _tiled_layer_kernel(x_ref, w_ref, b_ref, o_ref, acc_ref, *, act,
                        gelu_approx):
    k = pl.program_id(2)

    @pl.when(k == 0)
    def _init():
        acc_ref[...] = jnp.zeros_like(acc_ref)

    acc_ref[...] += jnp.dot(x_ref[...], w_ref[...],
                            preferred_element_type=jnp.float32)

    @pl.when(k == pl.num_programs(2) - 1)
    def _finalize():
        y = acc_ref[...] + b_ref[...]
        o_ref[...] = _apply_activation(y, act, gelu_approx).astype(o_ref.dtype)


def _tiled_layer_append_kernel(x_ref, w_ref, a_ref, wa_ref, b_ref, o_ref,
                               acc_ref, *, act, gelu_approx):
    # append matmul + bias + activation fused into the finalize step: no extra
    # HBM passes over the (B, d_out) intermediate and no extra launches.
    k = pl.program_id(2)

    @pl.when(k == 0)
    def _init():
        acc_ref[...] = jnp.zeros_like(acc_ref)

    acc_ref[...] += jnp.dot(x_ref[...], w_ref[...],
                            preferred_element_type=jnp.float32)

    @pl.when(k == pl.num_programs(2) - 1)
    def _finalize():
        y = acc_ref[...] + jnp.dot(a_ref[...], wa_ref[...],
                                   preferred_element_type=jnp.float32)
        y = y + b_ref[...]
        o_ref[...] = _apply_activation(y, act, gelu_approx).astype(o_ref.dtype)


def _linear_act_tiled(x, w, b, act, *, tb, out_dtype, gelu_approx,
                      a=None, wa=None):
    B_pad, d_in_pad = x.shape
    d_out_pad = w.shape[1]
    cands = (1024, 512, 256, 128) if _big_vmem() else (512, 256, 128)
    tn = _pick_tile(d_out_pad, cands)
    tk = _pick_tile(d_in_pad, cands)
    nk = d_in_pad // tk

    w_spec = pl.BlockSpec((tk, tn), lambda i, j, k: (k, j))
    if nk > 2:
        # deeper buffering hides exposed weight DMA when K is split
        w_spec = pl.BlockSpec((tk, tn), lambda i, j, k: (k, j),
                              pipeline_mode=pl.Buffered(3))

    inputs = [x, w]
    in_specs = [pl.BlockSpec((tb, tk), lambda i, j, k: (i, k)), w_spec]
    flops = 2 * B_pad * d_in_pad * d_out_pad
    bytes_acc = (x.size * x.dtype.itemsize + w.size * w.dtype.itemsize
                 + b.size * 4 + B_pad * d_out_pad * jnp.dtype(out_dtype).itemsize)
    if a is not None:
        d_app_pad = a.shape[1]
        inputs += [a, wa]
        in_specs += [pl.BlockSpec((tb, d_app_pad), lambda i, j, k: (i, 0)),
                     pl.BlockSpec((d_app_pad, tn), lambda i, j, k: (0, j))]
        flops += 2 * B_pad * d_app_pad * d_out_pad
        bytes_acc += a.size * a.dtype.itemsize + wa.size * wa.dtype.itemsize
        kernel = functools.partial(_tiled_layer_append_kernel, act=act,
                                   gelu_approx=gelu_approx)
    else:
        kernel = functools.partial(_tiled_layer_kernel, act=act,
                                   gelu_approx=gelu_approx)
    inputs.append(b)
    in_specs.append(pl.BlockSpec((1, tn), lambda i, j, k: (0, j)))

    return pl.pallas_call(
        kernel,
        out_shape=jax.ShapeDtypeStruct((B_pad, d_out_pad), out_dtype),
        grid_spec=pltpu.PrefetchScalarGridSpec(
            num_scalar_prefetch=0,
            grid=(B_pad // tb, d_out_pad // tn, nk),
            in_specs=in_specs,
            out_specs=pl.BlockSpec((tb, tn), lambda i, j, k: (i, j)),
            scratch_shapes=[pltpu.VMEM((tb, tn), jnp.float32)],
        ),
        compiler_params=pltpu.CompilerParams(
            dimension_semantics=("parallel", "parallel", "arbitrary")),
        cost_estimate=pl.CostEstimate(
            flops=int(flops),
            transcendentals=int(B_pad * d_out_pad
                                if act in _TRANSCENDENTAL_ACTS else 0),
            bytes_accessed=int(bytes_acc)),
    )(*inputs)


def _mlp_tiled(x_pad, a_pad, params, acts, cdt, tb, out_dtype, gelu_approx):
    h = _maybe_cast(x_pad, cdt)
    a = None if a_pad is None else _maybe_cast(a_pad, cdt)
    n = len(params)
    for l, (p, act) in enumerate(zip(params, acts)):
        last = (l == n - 1)
        odt = out_dtype if last else cdt
        w = _maybe_cast(p["w_t"], cdt)
        if p["w_a"] is None:
            h = _linear_act_tiled(h, w, p["b"], act, tb=tb, out_dtype=odt,
                                  gelu_approx=gelu_approx)
        else:
            h = _linear_act_tiled(h, w, p["b"], act, tb=tb, out_dtype=odt,
                                  gelu_approx=gelu_approx,
                                  a=a, wa=_maybe_cast(p["w_a"], cdt))
    return h


# ---------------------------------------------------------------------------
# Parameter init (mirrors nn.Linear default, stores lane-padded (in,out) W^T)
# ---------------------------------------------------------------------------
def init_mlp_params(key, dim_list, append_dim=0, append_layers=None,
                    out_bias_init=None, dtype=jnp.float32):
    append_layers = list(append_layers) if append_layers is not None else []
    params = []
    num_layer = len(dim_list) - 1
    for idx in range(num_layer):
        i_dim = dim_list[idx]
        o_dim = dim_list[idx + 1]
        has_app = append_dim > 0 and idx in append_layers
        fan_in = i_dim + (append_dim if has_app else 0)
        bound = 1.0 / math.sqrt(fan_in)
        key, kw, ka, kb = jax.random.split(key, 4)

        i_pad, o_pad = _round_up(i_dim, 128), _round_up(o_dim, 128)
        # zero-padded rows/cols are mathematically inert; lane-dense for MXU/vst
        w = jnp.zeros((i_pad, o_pad), dtype).at[:i_dim, :o_dim].set(
            jax.random.uniform(kw, (i_dim, o_dim), dtype, -bound, bound))
        w_a, d_app = None, 0
        if has_app:
            a_pad_dim = _round_up(append_dim, 128)
            w_a = jnp.zeros((a_pad_dim, o_pad), dtype).at[:append_dim, :o_dim].set(
                jax.random.uniform(ka, (append_dim, o_dim), dtype, -bound, bound))
            d_app = append_dim

        b_vals = jax.random.uniform(kb, (o_dim,), dtype, -bound, bound)
        if out_bias_init is not None and idx == num_layer - 1:
            b_vals = jnp.full((o_dim,), out_bias_init, dtype)
        b = jnp.zeros((1, o_pad), jnp.float32).at[0, :o_dim].set(
            b_vals.astype(jnp.float32))

        params.append({"w_t": w, "w_a": w_a, "b": b,
                       "d_in": i_dim, "d_out": o_dim, "d_app": d_app})
    return params


def cast_params(params, compute_dtype):
    """Pre-cast weights to the compute dtype once (do this outside the hot loop
    so each forward call does not pay an extra HBM pass over the weights)."""
    out = []
    for p in params:
        q = dict(p)
        q["w_t"] = _maybe_cast(p["w_t"], compute_dtype)
        if p["w_a"] is not None:
            q["w_a"] = _maybe_cast(p["w_a"], compute_dtype)
        out.append(q)
    return out


# ---------------------------------------------------------------------------
# Forward pass (matches MLP.forward for the default constructor args)
# ---------------------------------------------------------------------------
def mlp_forward(params, x, append=None, activation_type="Tanh",
                out_activation_type="Identity", compute_dtype=None,
                batch_tile=None, gelu_approximate=False, force_tiled=False):
    # TODO(synk): use_layernorm / dropout branches of the torch module are not
    # exercised by the default constructor args and are omitted here.
    # compute_dtype=jnp.bfloat16 is the recommended fast path on v6e/v7x
    # (f32 accumulation is kept); the default (input dtype) preserves strict
    # parity with the torch module.
    out_dtype = x.dtype
    cdt = jnp.dtype(x.dtype if compute_dtype is None else compute_dtype)
    B, d_in = x.shape
    d_in_pad = params[0]["w_t"].shape[0]
    n_layers = len(params)
    acts = [activation_type if l != n_layers - 1 else out_activation_type
            for l in range(n_layers)]

    has_append = any(p["w_a"] is not None for p in params)
    if has_append and append is None:
        raise ValueError("these params expect an `append` input")

    # Batch tiling: big tiles on 128 MiB chips; align to the packed sublane
    # granularity of the compute dtype (8 f32 / 16 bf16 / 32 int8-fp8).
    if batch_tile is None:
        batch_tile = 512 if _big_vmem() else 256
    pack = {4: 8, 2: 16, 1: 32}.get(cdt.itemsize, 8)
    tb = min(batch_tile, _round_up(B, pack))
    # Only split the batch for megacore sharding on 2-TC parts (v7x); on
    # single-TC v5e/v6e a split just adds per-grid-step overhead.
    if _has_two_tensorcores() and _round_up(B, tb) // tb < 2 and tb % (2 * pack) == 0:
        tb //= 2
    B_pad = _round_up(B, tb)

    # Single zero-pad of the activations for the whole network (batch + lanes).
    x_pad = jnp.zeros((B_pad, d_in_pad), cdt).at[:B, :d_in].set(x.astype(cdt))
    a_pad = None
    d_app_pad = 0
    if has_append:
        d_app = append.shape[-1]
        d_app_pad = next(p["w_a"].shape[0] for p in params if p["w_a"] is not None)
        a_pad = jnp.zeros((B_pad, d_app_pad), cdt).at[:B, :d_app].set(
            append.astype(cdt))

    est = _fused_vmem_bytes(tb, params, cdt, d_app_pad)
    if (not force_tiled) and est <= _fused_budget_bytes():
        out = _mlp_fused(x_pad, a_pad, params, acts, cdt, tb, out_dtype, est,
                         gelu_approximate)
    else:
        out = _mlp_tiled(x_pad, a_pad, params, acts, cdt, tb, out_dtype,
                         gelu_approximate)

    d_out = params[-1]["d_out"]
    return out[:B, :d_out].astype(out_dtype)


# ---------------------------------------------------------------------------
# Pure-JAX reference (uses the un-padded slices of the stored params)
# ---------------------------------------------------------------------------
def mlp_forward_ref(params, x, append=None, activation_type="Tanh",
                    out_activation_type="Identity"):
    n = len(params)
    for l, p in enumerate(params):
        w = p["w_t"][: p["d_in"], : p["d_out"]]
        b = p["b"][0, : p["d_out"]]
        h = x @ w + b
        if p["w_a"] is not None and append is not None:
            wa = p["w_a"][: p["d_app"], : p["d_out"]]
            h = h + append @ wa
        act = activation_type if l != n - 1 else out_activation_type
        x = _apply_activation(h.astype(jnp.float32), act).astype(x.dtype)
    return x


if __name__ == "__main__":
    key = jax.random.PRNGKey(0)
    k_param, k_param2, k_x, k_a = jax.random.split(key, 4)

    dim_list = [16, 32, 32, 8]
    batch = 8

    # 1) plain MLP, f32, fused single-kernel path
    params = init_mlp_params(k_param, dim_list)
    x = jax.random.normal(k_x, (batch, dim_list[0]), jnp.float32)
    out = jax.block_until_ready(mlp_forward(params, x))
    ref = mlp_forward_ref(params, x)
    assert out.shape == (batch, dim_list[-1])
    assert jnp.allclose(out, ref, atol=1e-5, rtol=1e-5)

    # 2) append path (split matmul inside the fused kernel, no concat)
    params_app = init_mlp_params(k_param2, dim_list, append_dim=4,
                                 append_layers=[1])
    append = jax.random.normal(k_a, (batch, 4), jnp.float32)
    out_app = jax.block_until_ready(mlp_forward(params_app, x, append=append))
    ref_app = mlp_forward_ref(params_app, x, append=append)
    assert jnp.allclose(out_app, ref_app, atol=1e-5, rtol=1e-5)

    # 3) bf16 MXU inputs (pre-cast weights), f32 accumulate / activations
    params_bf16 = cast_params(params, jnp.bfloat16)
    out_bf16 = jax.block_until_ready(
        mlp_forward(params_bf16, x, compute_dtype=jnp.bfloat16))
    assert jnp.allclose(out_bf16, ref, atol=5e-2, rtol=5e-2)

    # 4) per-layer K/N-tiled fallback (used when weights would not fit VMEM)
    out_tiled = jax.block_until_ready(mlp_forward(params, x, force_tiled=True))
    assert jnp.allclose(out_tiled, ref, atol=1e-5, rtol=1e-5)

    # 5) tiled fallback with the append matmul fused into the kernel finalize
    out_app_tiled = jax.block_until_ready(
        mlp_forward(params_app, x, append=append, force_tiled=True))
    assert jnp.allclose(out_app_tiled, ref_app, atol=1e-5, rtol=1e-5)

    print("KERNEL_OK")
</pallas_src>

<mosaic_0001>
module attributes {stable_mosaic.version = 11 : i64} {
  func.func @_fused_mlp_kernel(%arg0: i32, %arg1: memref<8x128xf32, #tpu.memory_space<vmem>>, %arg2: memref<128x128xf32, #tpu.memory_space<vmem>>, %arg3: memref<1x128xf32, #tpu.memory_space<vmem>>, %arg4: memref<128x128xf32, #tpu.memory_space<vmem>>, %arg5: memref<1x128xf32, #tpu.memory_space<vmem>>, %arg6: memref<128x128xf32, #tpu.memory_space<vmem>>, %arg7: memref<1x128xf32, #tpu.memory_space<vmem>>, %arg8: memref<8x128xf32, #tpu.memory_space<vmem>>) attributes {dimension_semantics = [#tpu.dimension_semantics<parallel>], iteration_bounds = array<i64: 1>, scalar_prefetch = 0 : i64, scratch_operands = 0 : i64, tpu.core_type = #tpu.core_type<tc>, window_params = [{transform_indices = @transform_0, window_bounds = array<i64: 8, 128>}, {pipeline_mode = #tpu.pipeline_mode<synchronous>, transform_indices = @transform_1, window_bounds = array<i64: 128, 128>}, {pipeline_mode = #tpu.pipeline_mode<synchronous>, transform_indices = @transform_2, window_bounds = array<i64: 1, 128>}, {pipeline_mode = #tpu.pipeline_mode<synchronous>, transform_indices = @transform_3, window_bounds = array<i64: 128, 128>}, {pipeline_mode = #tpu.pipeline_mode<synchronous>, transform_indices = @transform_4, window_bounds = array<i64: 1, 128>}, {pipeline_mode = #tpu.pipeline_mode<synchronous>, transform_indices = @transform_5, window_bounds = array<i64: 128, 128>}, {pipeline_mode = #tpu.pipeline_mode<synchronous>, transform_indices = @transform_6, window_bounds = array<i64: 1, 128>}, {transform_indices = @transform_7, window_bounds = array<i64: 8, 128>}]} {
    %c0 = arith.constant 0 : index
    %c0_0 = arith.constant 0 : index
    %0 = vector.load %arg1[%c0, %c0_0] : memref<8x128xf32, #tpu.memory_space<vmem>>, vector<8x128xf32>
    %c0_1 = arith.constant 0 : index
    %c0_2 = arith.constant 0 : index
    %1 = vector.load %arg2[%c0_1, %c0_2] : memref<128x128xf32, #tpu.memory_space<vmem>>, vector<128x128xf32>
    %cst = arith.constant dense<0.000000e+00> : vector<8x128xf32>
    %2 = tpu.matmul %0, %1, %cst {dimension_numbers = #tpu.dot_dimension_numbers<[1], [0], [0], [1], [0, 0, 1, 1], [], []>} : vector<8x128xf32>, vector<128x128xf32>, vector<8x128xf32> -> vector<8x128xf32>
    %c0_3 = arith.constant 0 : index
    %c0_4 = arith.constant 0 : index
    %3 = vector.load %arg3[%c0_3, %c0_4] : memref<1x128xf32, #tpu.memory_space<vmem>>, vector<1x128xf32>
    %4 = vector.broadcast %3 : vector<1x128xf32> to vector<8x128xf32>
    %5 = arith.addf %2, %4 : vector<8x128xf32>
    %6 = math.tanh %5 : vector<8x128xf32>
    %c0_5 = arith.constant 0 : index
    %c0_6 = arith.constant 0 : index
    %7 = vector.load %arg4[%c0_5, %c0_6] : memref<128x128xf32, #tpu.memory_space<vmem>>, vector<128x128xf32>
    %cst_7 = arith.constant dense<0.000000e+00> : vector<8x128xf32>
    %8 = tpu.matmul %6, %7, %cst_7 {dimension_numbers = #tpu.dot_dimension_numbers<[1], [0], [0], [1], [0, 0, 1, 1], [], []>} : vector<8x128xf32>, vector<128x128xf32>, vector<8x128xf32> -> vector<8x128xf32>
    %c0_8 = arith.constant 0 : index
    %c0_9 = arith.constant 0 : index
    %9 = vector.load %arg5[%c0_8, %c0_9] : memref<1x128xf32, #tpu.memory_space<vmem>>, vector<1x128xf32>
    %10 = vector.broadcast %9 : vector<1x128xf32> to vector<8x128xf32>
    %11 = arith.addf %8, %10 : vector<8x128xf32>
    %12 = math.tanh %11 : vector<8x128xf32>
    %c0_10 = arith.constant 0 : index
    %c0_11 = arith.constant 0 : index
    %13 = vector.load %arg6[%c0_10, %c0_11] : memref<128x128xf32, #tpu.memory_space<vmem>>, vector<128x128xf32>
    %cst_12 = arith.constant dense<0.000000e+00> : vector<8x128xf32>
    %14 = tpu.matmul %12, %13, %cst_12 {dimension_numbers = #tpu.dot_dimension_numbers<[1], [0], [0], [1], [0, 0, 1, 1], [], []>} : vector<8x128xf32>, vector<128x128xf32>, vector<8x128xf32> -> vector<8x128xf32>
    %c0_13 = arith.constant 0 : index
    %c0_14 = arith.constant 0 : index
    %15 = vector.load %arg7[%c0_13, %c0_14] : memref<1x128xf32, #tpu.memory_space<vmem>>, vector<1x128xf32>
    %16 = vector.broadcast %15 : vector<1x128xf32> to vector<8x128xf32>
    %17 = arith.addf %14, %16 : vector<8x128xf32>
    %c0_15 = arith.constant 0 : index
    %c0_16 = arith.constant 0 : index
    %18 = vector.load %arg8[%c0_15, %c0_16] : memref<8x128xf32, #tpu.memory_space<vmem>>, vector<8x128xf32>
    tpu.vector_store %arg8[%c0_15, %c0_16], %17 {strides = array<i32>} : memref<8x128xf32, #tpu.memory_space<vmem>>, vector<8x128xf32>,
    return
  }
  func.func @transform_0(%arg0: i32) -> (i32, i32) {
    %c0_i32 = arith.constant 0 : i32
    %c0_i32_0 = arith.constant 0 : i32
    return %arg0, %c0_i32 : i32, i32
  }
  func.func @transform_1(%arg0: i32) -> (i32, i32) {
    %c0_i32 = arith.constant 0 : i32
    %c0_i32_0 = arith.constant 0 : i32
    %c0_i32_1 = arith.constant 0 : i32
    return %c0_i32, %c0_i32_0 : i32, i32
  }
  func.func @transform_2(%arg0: i32) -> (i32, i32) {
    %c0_i32 = arith.constant 0 : i32
    %c0_i32_0 = arith.constant 0 : i32
    %c0_i32_1 = arith.constant 0 : i32
    return %c0_i32, %c0_i32_0 : i32, i32
  }
  func.func @transform_3(%arg0: i32) -> (i32, i32) {
    %c0_i32 = arith.constant 0 : i32
    %c0_i32_0 = arith.constant 0 : i32
    %c0_i32_1 = arith.constant 0 : i32
    return %c0_i32, %c0_i32_0 : i32, i32
  }
  func.func @transform_4(%arg0: i32) -> (i32, i32) {
    %c0_i32 = arith.constant 0 : i32
    %c0_i32_0 = arith.constant 0 : i32
    %c0_i32_1 = arith.constant 0 : i32
    return %c0_i32, %c0_i32_0 : i32, i32
  }
  func.func @transform_5(%arg0: i32) -> (i32, i32) {
    %c0_i32 = arith.constant 0 : i32
    %c0_i32_0 = arith.constant 0 : i32
    %c0_i32_1 = arith.constant 0 : i32
    return %c0_i32, %c0_i32_0 : i32, i32
  }
  func.func @transform_6(%arg0: i32) -> (i32, i32) {
    %c0_i32 = arith.constant 0 : i32
    %c0_i32_0 = arith.constant 0 : i32
    %c0_i32_1 = arith.constant 0 : i32
    return %c0_i32, %c0_i32_0 : i32, i32
  }
  func.func @transform_7(%arg0: i32) -> (i32, i32) {
    %c0_i32 = arith.constant 0 : i32
    %c0_i32_0 = arith.constant 0 : i32
    return %arg0, %c0_i32 : i32, i32
  }
}

</mosaic_0001>

<llo_original>
// kernel: tpu_custom_call.1
$region0: #{tpu_custom_call.1}
  #allocation0 [shape = 'u32[]', space=smem, size = 0x4, offset = 0x4, fixed_abs, tag = 'smem constant byte address 0x4 - core index']
  #allocation1 [shape = 'u32[72,128]{1,0:T(1,128)}', space=vmem, size = 0x9000, scoped, tag = 'internal scratch']
  %s0 = inlined_call_operand.hbm [shape: f32[8,128], index: 0, kind: input, shape index: {}]
  %s1 = inlined_call_operand.hbm [shape: f32[128,128], index: 1, kind: input, shape index: {}]
  %s2 = inlined_call_operand.vmem [shape: f32[1,128], index: 2, kind: input, shape index: {}]
  %s3 = inlined_call_operand.hbm [shape: f32[128,128], index: 3, kind: input, shape index: {}]
  %s4 = inlined_call_operand.vmem [shape: f32[1,128], index: 4, kind: input, shape index: {}]
  %s5 = inlined_call_operand.hbm [shape: f32[128,128], index: 5, kind: input, shape index: {}]
  %s6 = inlined_call_operand.vmem [shape: f32[1,128], index: 6, kind: input, shape index: {}]
  %s7 = inlined_call_operand.hbm [shape: f32[8,128], index: 7, kind: output, shape index: {}]
  %s8 = sld [smem:[#allocation0]]
  $region54: #{tpu_custom_call.1} parent=0
    _
  %s10 = ssub.s32 1, %s8
  %s11 = scalar_select 0, %s10, %s8
  $region1: #{tpu_custom_call.1} parent=0
    #allocation2 [shape = 'u8[4096]{0}', space=vmem, size = 0x1000, scoped, tag = 'input window, operand 0, single buffered']
    #allocation3 [shape = 's32[1]{0}', space=sflag, size = 0x4, scoped, tag = 'scoped memory for tpu_custom_call.1']
    #allocation4 [shape = 's32[1]{0}', space=sflag, size = 0x4, scoped, tag = 'scoped memory for tpu_custom_call.1']
    #allocation5 [shape = 'u8[65536]{0}', space=vmem, size = 0x10000, scoped, tag = 'input window, operand 1, single buffered']
    #allocation6 [shape = 's32[1]{0}', space=sflag, size = 0x4, scoped, tag = 'scoped memory for tpu_custom_call.1']
    #allocation7 [shape = 'u8[65536]{0}', space=vmem, size = 0x10000, scoped, tag = 'input window, operand 3, single buffered']
    #allocation8 [shape = 'u8[65536]{0}', space=vmem, size = 0x10000, scoped, tag = 'input window, operand 5, single buffered']
    #allocation9 [shape = 's32[1]{0}', space=sflag, size = 0x4, scoped, tag = 'scoped memory for tpu_custom_call.1']
    #allocation10 [shape = 'u8[4096]{0}', space=vmem, size = 0x1000, scoped, tag = 'output window, operand 0, single buffered']
    %12 = vsyncpa [#allocation3], 0
    %13 = vsyncpa [#allocation6], 0
    %14 = vsyncpa [#allocation9], 0
    %15 = vsyncpa [#allocation4], 0
    // Predicated region
    $region2: #{tpu_custom_call.1} parent=1 // pred_check
      _
    $region3: #{tpu_custom_call.1} parent=1 // pred_check_branch
      %17 = sbr.rel (0) target = $region5
    $region4: #{tpu_custom_call.1} parent=1 // pred_region
      %19 = vsyncadd [#allocation3], 0
      %s21 = sshll.u32 %s0, 4
      %s22 = int_to_ptr.hbm [resolvable:$true] %s21
      %s23 = sshll.u32 [#allocation2], 4
      %s24 = int_to_ptr.vmem [resolvable:$true] %s23
      %26 = dma.hbm_to_vmem [thread:$0]  %s22, 128, %s24, [#allocation3]
    $region5: #{tpu_custom_call.1} parent=1 // pred_fallthru
      _
    // Predicated region
    $region6: #{tpu_custom_call.1} parent=1 // pred_check
      _
    $region7: #{tpu_custom_call.1} parent=1 // pred_check_branch
      %28 = sbr.rel (0) target = $region9
    $region8: #{tpu_custom_call.1} parent=1 // pred_region
      %30 = vsyncadd [#allocation6], 0
      %s31 = sshll.u32 %s1, 4
      %s32 = int_to_ptr.hbm [resolvable:$true] %s31
      %s33 = sshll.u32 [#allocation5], 4
      %s34 = int_to_ptr.vmem [resolvable:$true] %s33
      %39 = dma.hbm_to_vmem [thread:$0]  %s32, 2048, %s34, [#allocation6], 128, 128, 8
    $region9: #{tpu_custom_call.1} parent=1 // pred_fallthru
      _
    // Predicated region
    $region10: #{tpu_custom_call.1} parent=1 // pred_check
      _
    $region11: #{tpu_custom_call.1} parent=1 // pred_check_branch
      %41 = sbr.rel (0) target = $region13
    $region12: #{tpu_custom_call.1} parent=1 // pred_region
      _
    $region13: #{tpu_custom_call.1} parent=1 // pred_fallthru
      _
    // Predicated region
    $region14: #{tpu_custom_call.1} parent=1 // pred_check
      _
    $region15: #{tpu_custom_call.1} parent=1 // pred_check_branch
      %43 = sbr.rel (0) target = $region17
    $region16: #{tpu_custom_call.1} parent=1 // pred_region
      %45 = vsyncadd [#allocation6], 0
      %s46 = sshll.u32 %s3, 4
      %s47 = int_to_ptr.hbm [resolvable:$true] %s46
      %s48 = sshll.u32 [#allocation7], 4
      %s49 = int_to_ptr.vmem [resolvable:$true] %s48
      %54 = dma.hbm_to_vmem [thread:$0]  %s47, 2048, %s49, [#allocation6], 128, 128, 8
    $region17: #{tpu_custom_call.1} parent=1 // pred_fallthru
      _
    // Predicated region
    $region18: #{tpu_custom_call.1} parent=1 // pred_check
      _
    $region19: #{tpu_custom_call.1} parent=1 // pred_check_branch
      %56 = sbr.rel (0) target = $region21
    $region20: #{tpu_custom_call.1} parent=1 // pred_region
      _
    $region21: #{tpu_custom_call.1} parent=1 // pred_fallthru
      _
    // Predicated region
    $region22: #{tpu_custom_call.1} parent=1 // pred_check
      _
    $region23: #{tpu_custom_call.1} parent=1 // pred_check_branch
      %58 = sbr.rel (0) target = $region25
    $region24: #{tpu_custom_call.1} parent=1 // pred_region
      %60 = vsyncadd [#allocation9], 0
      %s61 = sshll.u32 %s5, 4
      %s62 = int_to_ptr.hbm [resolvable:$true] %s61
      %s63 = sshll.u32 [#allocation8], 4
      %s64 = int_to_ptr.vmem [resolvable:$true] %s63
      %69 = dma.hbm_to_vmem [thread:$0]  %s62, 2048, %s64, [#allocation9], 128, 128, 8
    $region25: #{tpu_custom_call.1} parent=1 // pred_fallthru
      _
    // Predicated region
    $region26: #{tpu_custom_call.1} parent=1 // pred_check
      _
    $region27: #{tpu_custom_call.1} parent=1 // pred_check_branch
      %71 = sbr.rel (0) target = $region29
    $region28: #{tpu_custom_call.1} parent=1 // pred_region
      _
    $region29: #{tpu_custom_call.1} parent=1 // pred_fallthru
      _
    // Predicated region
    $region30: #{tpu_custom_call.1} parent=1 // pred_check
      _
    $region31: #{tpu_custom_call.1} parent=1 // pred_check_branch
      %73 = sbr.rel (0) target = $region33
    $region32: #{tpu_custom_call.1} parent=1 // pred_region
      %75 = dma.done [#allocation3], 128
    $region33: #{tpu_custom_call.1} parent=1 // pred_fallthru
      _
    // Predicated region
    $region34: #{tpu_custom_call.1} parent=1 // pred_check
      _
    $region35: #{tpu_custom_call.1} parent=1 // pred_check_branch
      %77 = sbr.rel (0) target = $region37
    $region36: #{tpu_custom_call.1} parent=1 // pred_region
      %79 = dma.done [#allocation6], 2048
    $region37: #{tpu_custom_call.1} parent=1 // pred_fallthru
      _
    // Predicated region
    $region38: #{tpu_custom_call.1} parent=1 // pred_check
      _
    $region39: #{tpu_custom_call.1} parent=1 // pred_check_branch
      %81 = sbr.rel (0) target = $region41
    $region40: #{tpu_custom_call.1} parent=1 // pred_region
      %83 = dma.done [#allocation6], 2048
    $region41: #{tpu_custom_call.1} parent=1 // pred_fallthru
      _
    // Predicated region
    $region42: #{tpu_custom_call.1} parent=1 // pred_check
      _
    $region43: #{tpu_custom_call.1} parent=1 // pred_check_branch
      %85 = sbr.rel (0) target = $region45
    $region44: #{tpu_custom_call.1} parent=1 // pred_region
      %87 = dma.done [#allocation9], 2048
    $region45: #{tpu_custom_call.1} parent=1 // pred_fallthru
      _
    %v88 = vld [vmem:[#allocation2] sm:$0xff]
    %v89 = vld [vmem:[#allocation5] sm:$0xff]
    %v90 = vld [vmem:[#allocation5 + $0x8] sm:$0xff]
    %v91 = vld [vmem:[#allocation5 + $0x10] sm:$0xff]
    %v92 = vld [vmem:[#allocation5 + $0x18] sm:$0xff]
    %v93 = vld [vmem:[#allocation5 + $0x20] sm:$0xff]
    %v94 = vld [vmem:[#allocation5 + $0x28] sm:$0xff]
    %v95 = vld [vmem:[#allocation5 + $0x30] sm:$0xff]
    %v96 = vld [vmem:[#allocation5 + $0x38] sm:$0xff]
    %v97 = vld [vmem:[#allocation5 + $0x40] sm:$0xff]
    %v98 = vld [vmem:[#allocation5 + $0x48] sm:$0xff]
    %v99 = vld [vmem:[#allocation5 + $0x50] sm:$0xff]
    %v100 = vld [vmem:[#allocation5 + $0x58] sm:$0xff]
    %v101 = vld [vmem:[#allocation5 + $0x60] sm:$0xff]
    %v102 = vld [vmem:[#allocation5 + $0x68] sm:$0xff]
    %v103 = vld [vmem:[#allocation5 + $0x70] sm:$0xff]
    %v104 = vld [vmem:[#allocation5 + $0x78] sm:$0xff]
    %v105 = vld [vmem:[%s2] sm:$0x1]
    %v107 = vperm.slane %v105, 0
    %109 = vmatpush.msra.mxu0 %v104
    %110 = vmatpush.msra.mxu0 %v103
    %111 = vmatpush.msra.mxu0 %v102
    %112 = vmatpush.msra.mxu0 %v101
    %113 = vmatpush.msra.mxu0 %v100
    %114 = vmatpush.msra.mxu0 %v99
    %115 = vmatpush.msra.mxu0 %v98
    %116 = vmatpush.msra.mxu0 %v97
    %117 = vmatpush.msra.mxu0 %v96
    %118 = vmatpush.msra.mxu0 %v95
    %119 = vmatpush.msra.mxu0 %v94
    %120 = vmatpush.msra.mxu0 %v93
    %121 = vmatpush.msra.mxu0 %v92
    %122 = vmatpush.msra.mxu0 %v91
    %123 = vmatpush.msra.mxu0 %v90
    %124 = vmatpush.msra.mxu0 %v89
    %125 = vmatmul.f32.gmra.mxu0 %v88
    %v126 = vpop.f32.mrf.mxu0
    %v127 = vadd.f32 %v107, %v126
    %128 = vdwg.mxu0
    %v129 = vtanh.pop %v127
    %v130 = vld [vmem:[#allocation7] sm:$0xff]
    %v131 = vld [vmem:[#allocation7 + $0x8] sm:$0xff]
    %v132 = vld [vmem:[#allocation7 + $0x10] sm:$0xff]
    %v133 = vld [vmem:[#allocation7 + $0x18] sm:$0xff]
    %v134 = vld [vmem:[#allocation7 + $0x20] sm:$0xff]
    %v135 = vld [vmem:[#allocation7 + $0x28] sm:$0xff]
    %v136 = vld [vmem:[#allocation7 + $0x30] sm:$0xff]
    %v137 = vld [vmem:[#allocation7 + $0x38] sm:$0xff]
    %v138 = vld [vmem:[#allocation7 + $0x40] sm:$0xff]
    %v139 = vld [vmem:[#allocation7 + $0x48] sm:$0xff]
    %v140 = vld [vmem:[#allocation7 + $0x50] sm:$0xff]
    %v141 = vld [vmem:[#allocation7 + $0x58] sm:$0xff]
    %v142 = vld [vmem:[#allocation7 + $0x60] sm:$0xff]
    %v143 = vld [vmem:[#allocation7 + $0x68] sm:$0xff]
    %v144 = vld [vmem:[#allocation7 + $0x70] sm:$0xff]
    %v145 = vld [vmem:[#allocation7 + $0x78] sm:$0xff]
    %v146 = vld [vmem:[%s4] sm:$0x1]
    %v148 = vperm.slane %v146, 0
    %150 = vmatpush.msra.mxu0 %v145
    %151 = vmatpush.msra.mxu0 %v144
    %152 = vmatpush.msra.mxu0 %v143
    %153 = vmatpush.msra.mxu0 %v142
    %154 = vmatpush.msra.mxu0 %v141
    %155 = vmatpush.msra.mxu0 %v140
    %156 = vmatpush.msra.mxu0 %v139
    %157 = vmatpush.msra.mxu0 %v138
    %158 = vmatpush.msra.mxu0 %v137
    %159 = vmatpush.msra.mxu0 %v136
    %160 = vmatpush.msra.mxu0 %v135
    %161 = vmatpush.msra.mxu0 %v134
    %162 = vmatpush.msra.mxu0 %v133
    %163 = vmatpush.msra.mxu0 %v132
    %164 = vmatpush.msra.mxu0 %v131
    %165 = vmatpush.msra.mxu0 %v130
    %166 = vmatmul.f32.gmra.mxu0 %v129
    %v167 = vpop.f32.mrf.mxu0
    %v168 = vadd.f32 %v148, %v167
    %169 = vdwg.mxu0
    %v170 = vtanh.pop %v168
    %v171 = vld [vmem:[#allocation8] sm:$0xff]
    %v172 = vld [vmem:[#allocation8 + $0x8] sm:$0xff]
    %v173 = vld [vmem:[#allocation8 + $0x10] sm:$0xff]
    %v174 = vld [vmem:[#allocation8 + $0x18] sm:$0xff]
    %v175 = vld [vmem:[#allocation8 + $0x20] sm:$0xff]
    %v176 = vld [vmem:[#allocation8 + $0x28] sm:$0xff]
    %v177 = vld [vmem:[#allocation8 + $0x30] sm:$0xff]
    %v178 = vld [vmem:[#allocation8 + $0x38] sm:$0xff]
    %v179 = vld [vmem:[#allocation8 + $0x40] sm:$0xff]
    %v180 = vld [vmem:[#allocation8 + $0x48] sm:$0xff]
    %v181 = vld [vmem:[#allocation8 + $0x50] sm:$0xff]
    %v182 = vld [vmem:[#allocation8 + $0x58] sm:$0xff]
    %v183 = vld [vmem:[#allocation8 + $0x60] sm:$0xff]
    %v184 = vld [vmem:[#allocation8 + $0x68] sm:$0xff]
    %v185 = vld [vmem:[#allocation8 + $0x70] sm:$0xff]
    %v186 = vld [vmem:[#allocation8 + $0x78] sm:$0xff]
    %v187 = vld [vmem:[%s6] sm:$0x1]
    %v189 = vperm.slane %v187, 0
    %191 = vmatpush.msra.mxu0 %v186
    %192 = vmatpush.msra.mxu0 %v185
    %193 = vmatpush.msra.mxu0 %v184
    %194 = vmatpush.msra.mxu0 %v183
    %195 = vmatpush.msra.mxu0 %v182
    %196 = vmatpush.msra.mxu0 %v181
    %197 = vmatpush.msra.mxu0 %v180
    %198 = vmatpush.msra.mxu0 %v179
    %199 = vmatpush.msra.mxu0 %v178
    %200 = vmatpush.msra.mxu0 %v177
    %201 = vmatpush.msra.mxu0 %v176
    %202 = vmatpush.msra.mxu0 %v175
    %203 = vmatpush.msra.mxu0 %v174
    %204 = vmatpush.msra.mxu0 %v173
    %205 = vmatpush.msra.mxu0 %v172
    %206 = vmatpush.msra.mxu0 %v171
    %207 = vmatmul.f32.gmra.mxu0 %v170
    %v208 = vpop.f32.mrf.mxu0
    %v209 = vadd.f32 %v189, %v208
    %210 = vdwg.mxu0
    %211 = vst [vmem:[#allocation10] sm:$0xff] %v209
    // Predicated region
    $region46: #{tpu_custom_call.1} parent=1 // pred_check
      _
    $region47: #{tpu_custom_call.1} parent=1 // pred_check_branch
      %213 = sbr.rel (0) target = $region49
    $region48: #{tpu_custom_call.1} parent=1 // pred_region
      %215 = vsyncadd [#allocation4], 0
      %s217 = sshll.u32 [#allocation10], 4
      %s218 = int_to_ptr.vmem [resolvable:$true] %s217
      %s219 = sshll.u32 %s7, 4
      %s220 = int_to_ptr.hbm [resolvable:$true] %s219
      %222 = dma.vmem_to_hbm [thread:$0]  %s218, 128, %s220, [#allocation4]
    $region49: #{tpu_custom_call.1} parent=1 // pred_fallthru
      _
    // Predicated region
    $region50: #{tpu_custom_call.1} parent=1 // pred_check
      _
    $region51: #{tpu_custom_call.1} parent=1 // pred_check_branch
      %224 = sbr.rel (0) target = $region53
    $region52: #{tpu_custom_call.1} parent=1 // pred_region
      %226 = dma.done [#allocation4], 128
    $region53: #{tpu_custom_call.1} parent=1 // pred_fallthru
      _
    %227 = vsyncpa [#allocation3], 1
    %228 = vsyncpa [#allocation6], 1
    %229 = vsyncpa [#allocation9], 1
    %230 = vsyncpa [#allocation4], 1

</llo_original>
